<compile_context>
chip_gen: v7x
topology: tpu7x:2x2x1
jax: 0.10.0
libtpu: 0.0.40
codegen_flags: <defaults>
</compile_context>

<pallas_src>
import functools

import jax
import jax.numpy as jnp
from jax.experimental import pallas as pl
from jax.experimental.pallas import tpu as pltpu

INPUT_SIZE = 15 * 2        # 30 (logical)
OUTPUT_SIZE = 15 * 2       # 30 (logical)
LINEAR_SIZE = 128          # small hidden size for the test (module default is 1024)
NUM_STAGE = 2
NUM_LAYERS = 2 + 2 * NUM_STAGE   # w1, (stage a, stage b) x NUM_STAGE, w2

IN_PAD = 128               # input features zero-padded 30 -> 128 (lane-dense loads)
OUT_PAD = 128              # output features zero-padded 30 -> 128 (lane-dense stores)


# --------------------------------------------------------------------------- #
# Kernel
# --------------------------------------------------------------------------- #
def generate_model_kernel(x_ref, w_ref, b_ref, out_ref, *, ew_dtype, num_stage):
    """Full GenerateModel forward for one batch tile.

    w_ref: (2*num_stage+2, 128, 128) bf16 weight stack (w stored (in, out)).
    b_ref: (2*num_stage+2, 1, 128) bias stack in the elementwise dtype.
    Matmuls run on the MXU with f32 accumulation; bias add / ReLU / residual
    adds run in `ew_dtype` (bf16 on v6e/v7x, f32 on v5e).  Dropout is identity
    (inference mode).
    """
    def linear(h, k, relu):
        y = jnp.dot(h.astype(w_ref.dtype), w_ref[k],
                    preferred_element_type=jnp.float32).astype(ew_dtype)
        y = y + b_ref[k]
        if relu:
            y = jnp.maximum(y, 0.0)
        return y

    # w1 + relu (+ dropout == identity)
    y = linear(x_ref[...], 0, relu=True)

    # residual stages: y = y + relu(W_b relu(W_a y))
    for s in range(num_stage):
        h = linear(y, 1 + 2 * s, relu=True)
        h = linear(h, 2 + 2 * s, relu=True)
        y = y + h

    # w2 (no activation); padded output columns are zero by construction
    out_ref[...] = linear(y, 1 + 2 * num_stage, relu=False).astype(out_ref.dtype)


# --------------------------------------------------------------------------- #
# Parameters
# --------------------------------------------------------------------------- #
def init_params(key, linear_size=LINEAR_SIZE, num_stage=NUM_STAGE):
    """Deterministic synthetic parameters in torch-logical shapes.

    Weights stored (in, out) f32; biases (1, out) f32.
    """
    def lin(key, fan_in, fan_out):
        kw, kb = jax.random.split(key)
        scale = 1.0 / jnp.sqrt(jnp.float32(fan_in))
        w = jax.random.uniform(kw, (fan_in, fan_out), jnp.float32, -scale, scale)
        b = jax.random.uniform(kb, (1, fan_out), jnp.float32, -scale, scale)
        return w, b

    keys = jax.random.split(key, 2 + 2 * num_stage)
    params = {}
    params["w1"], params["b1"] = lin(keys[0], INPUT_SIZE, linear_size)
    for s in range(num_stage):
        params[f"s{s}a_w"], params[f"s{s}a_b"] = lin(keys[1 + 2 * s], linear_size, linear_size)
        params[f"s{s}b_w"], params[f"s{s}b_b"] = lin(keys[2 + 2 * s], linear_size, linear_size)
    params["w2"], params["b2"] = lin(keys[-1], linear_size, OUTPUT_SIZE)
    return params


def _prepare_params(params, matmul_dtype, ew_dtype):
    """Pad to lane-dense 128x128 layers and pack into two stacked operands.

    Returns (w_stack (L,128,128) matmul_dtype, b_stack (L,1,128) ew_dtype).
    Done ONCE per model (not per forward call).
    """
    H = params["w1"].shape[1]
    assert H == IN_PAD == OUT_PAD, (
        "weight stacking assumes linear_size == 128 (square padded layers)")

    def pad_w(w, rows, cols):
        out = jnp.zeros((rows, cols), matmul_dtype)
        return out.at[:w.shape[0], :w.shape[1]].set(w.astype(matmul_dtype))

    ws = [pad_w(params["w1"], IN_PAD, H)]
    bs = [params["b1"]]
    for s in range(NUM_STAGE):
        ws.append(params[f"s{s}a_w"].astype(matmul_dtype))
        bs.append(params[f"s{s}a_b"])
        ws.append(params[f"s{s}b_w"].astype(matmul_dtype))
        bs.append(params[f"s{s}b_b"])
    ws.append(pad_w(params["w2"], H, OUT_PAD))
    b2 = jnp.zeros((1, OUT_PAD), jnp.float32).at[:, :OUTPUT_SIZE].set(params["b2"])
    bs.append(b2)

    w_stack = jnp.stack(ws)                                    # (L, 128, 128)
    b_stack = jnp.stack([b.astype(ew_dtype) for b in bs])      # (L, 1, 128)
    return w_stack, b_stack


# --------------------------------------------------------------------------- #
# Wrapper
# --------------------------------------------------------------------------- #
def _chip_generation():
    """Best-effort TPU generation (5 / 6 / 7); defaults to 6 if unknown."""
    try:
        kind = jax.devices()[0].device_kind.lower()
    except Exception:
        return 6
    for gen in (7, 6, 5, 4, 3, 2):
        if f"v{gen}" in kind or f"tpu{gen}" in kind:
            return gen
    return 6


def _pick_tile(B, requested, *, num_cores=1):
    """Largest legal batch tile <= requested.

    A 2-way grid split is only taken when the chip has 2 TensorCores AND each
    core still gets >= 256 rows; otherwise one big tile (the grid is a serial
    loop on single-TC parts, so splitting only adds per-step overhead).
    """
    requested = min(requested, B)
    divisors = [d for d in range(1, B + 1) if B % d == 0]
    # bf16 activation tiles pack (16, 128) per vreg: use 16-multiples or the
    # full batch extent so blocks stay aligned.
    valid = [d for d in divisors if d == B or d % 16 == 0]
    cands = [d for d in valid if d <= requested]
    tile = max(cands) if cands else B
    if num_cores >= 2 and B // tile < 2:
        smaller = [d for d in valid if d < tile and B // d >= 2 and d >= 256]
        if smaller:
            tile = max(smaller)
    return tile


def _pallas_forward(x_pad, w_stack, b_stack, *, tile, ew_dtype, hidden):
    B = x_pad.shape[0]
    assert B % tile == 0

    weight_bytes = (int(w_stack.size) * w_stack.dtype.itemsize
                    + int(b_stack.size) * b_stack.dtype.itemsize)
    act_bytes = 2 * tile * (IN_PAD + OUT_PAD) * 2          # bf16 in/out, double-buffered
    inter_bytes = 6 * tile * hidden * 4                    # f32 upper bound on temporaries
    # Exact working set + slack, capped at 32 MiB (safe on the 64 MiB v7x part).
    vmem_limit = int(min(2 * weight_bytes + act_bytes + inter_bytes + (8 << 20),
                         32 << 20))

    flops = 2 * B * (INPUT_SIZE * hidden
                     + 2 * NUM_STAGE * hidden * hidden
                     + hidden * OUTPUT_SIZE)
    bytes_accessed = int(x_pad.size) * 2 + weight_bytes + B * OUT_PAD * 2
    cost = pl.CostEstimate(flops=int(flops), transcendentals=0,
                           bytes_accessed=int(bytes_accessed))

    kernel = functools.partial(generate_model_kernel,
                               ew_dtype=ew_dtype, num_stage=NUM_STAGE)

    return pl.pallas_call(
        kernel,
        out_shape=jax.ShapeDtypeStruct((B, OUT_PAD), jnp.bfloat16),
        grid_spec=pltpu.PrefetchScalarGridSpec(
            num_scalar_prefetch=0,
            grid=(B // tile,),
            in_specs=[
                pl.BlockSpec((tile, IN_PAD), lambda i: (i, 0)),
                pl.BlockSpec(w_stack.shape, lambda i: (0, 0, 0)),
                pl.BlockSpec(b_stack.shape, lambda i: (0, 0, 0)),
            ],
            out_specs=pl.BlockSpec((tile, OUT_PAD), lambda i: (i, 0)),
        ),
        compiler_params=pltpu.CompilerParams(
            dimension_semantics=("parallel",),
            vmem_limit_bytes=vmem_limit,
        ),
        cost_estimate=cost,
    )(x_pad, w_stack, b_stack)


def make_generate_model_forward(params, *, tile_b=None, matmul_dtype=jnp.bfloat16):
    """Build a jitted forward: x (B, 30) f32 -> (1, B, 30) f32.

    Weight padding / packing is hoisted here (runs once); the per-call path is
    a single jitted function (pad x -> pallas_call -> slice/cast).
    """
    gen = _chip_generation()
    num_cores = 2 if gen >= 7 else 1                      # v7x: 2 TCs per chip
    ew_dtype = jnp.bfloat16 if gen >= 6 else jnp.float32  # v5e has no bf16 VALU
    if tile_b is None:
        tile_b = 4096 if gen >= 7 else 2048

    hidden = params["w1"].shape[1]
    w_stack, b_stack = _prepare_params(params, matmul_dtype, ew_dtype)

    @jax.jit
    def forward(x, w_stack, b_stack):
        B = x.shape[0]
        tile = _pick_tile(B, tile_b, num_cores=num_cores)
        # Lane-dense bf16 input: zero-pad features 30 -> 128.
        x_pad = jnp.pad(x.astype(jnp.bfloat16),
                        ((0, 0), (0, IN_PAD - INPUT_SIZE)))
        out_pad = _pallas_forward(x_pad, w_stack, b_stack,
                                  tile=tile, ew_dtype=ew_dtype, hidden=hidden)
        # PyTorch forward does x.unsqueeze(0) before the first linear -> (1, B, 30).
        return out_pad[None, :, :OUTPUT_SIZE].astype(jnp.float32)

    return lambda x: forward(x, w_stack, b_stack)


def generate_model_forward(x, params, **kwargs):
    """One-off convenience wrapper (prefer make_generate_model_forward for reuse)."""
    return make_generate_model_forward(params, **kwargs)(x)


# --------------------------------------------------------------------------- #
# Reference + test
# --------------------------------------------------------------------------- #
def _reference_forward(x, params):
    """Pure-JAX f32 reference (inference-mode dropout == identity)."""
    relu = lambda v: jnp.maximum(v, 0.0)
    y = relu(x @ params["w1"] + params["b1"])
    for s in range(NUM_STAGE):
        h = relu(y @ params[f"s{s}a_w"] + params[f"s{s}a_b"])
        h = relu(h @ params[f"s{s}b_w"] + params[f"s{s}b_b"])
        y = y + h
    y = y @ params["w2"] + params["b2"]
    return y[None, :, :]


if __name__ == "__main__":
    key = jax.random.PRNGKey(0)
    k_x, k_p = jax.random.split(key)

    B = 16
    x = jax.random.normal(k_x, (B, INPUT_SIZE), jnp.float32)
    params = init_params(k_p)

    forward = make_generate_model_forward(params)
    out = jax.block_until_ready(forward(x))

    assert out.shape == (1, B, OUTPUT_SIZE), out.shape

    # TODO(synk): train-mode dropout (p=0.5) masks are not implemented; kernel is eval-mode.
    ref = _reference_forward(x, params)
    max_err = float(jnp.max(jnp.abs(out - ref)))
    assert jnp.allclose(out, ref, atol=5e-2, rtol=5e-2), (
        f"mismatch vs reference (max abs err {max_err})")

    print("KERNEL_OK")
</pallas_src>

<mosaic_0001>
module attributes {stable_mosaic.version = 11 : i64} {
  func.func @generate_model_kernel(%arg0: i32, %arg1: memref<16x128xbf16, #tpu.memory_space<vmem>>, %arg2: memref<6x128x128xbf16, #tpu.memory_space<vmem>>, %arg3: memref<6x1x128xbf16, #tpu.memory_space<vmem>>, %arg4: memref<16x128xbf16, #tpu.memory_space<vmem>>) attributes {dimension_semantics = [#tpu.dimension_semantics<parallel>], iteration_bounds = array<i64: 1>, scalar_prefetch = 0 : i64, scratch_operands = 0 : i64, tpu.core_type = #tpu.core_type<tc>, window_params = [{transform_indices = @transform_0, window_bounds = array<i64: 16, 128>}, {pipeline_mode = #tpu.pipeline_mode<synchronous>, transform_indices = @transform_1, window_bounds = array<i64: 6, 128, 128>}, {pipeline_mode = #tpu.pipeline_mode<synchronous>, transform_indices = @transform_2, window_bounds = array<i64: 6, 1, 128>}, {transform_indices = @transform_3, window_bounds = array<i64: 16, 128>}]} {
    %c0 = arith.constant 0 : index
    %c0_0 = arith.constant 0 : index
    %0 = vector.load %arg1[%c0, %c0_0] : memref<16x128xbf16, #tpu.memory_space<vmem>>, vector<16x128xbf16>
    %c0_1 = arith.constant 0 : index
    %c0_2 = arith.constant 0 : index
    %c0_3 = arith.constant 0 : index
    %1 = vector.load %arg2[%c0_1, %c0_2, %c0_3] : memref<6x128x128xbf16, #tpu.memory_space<vmem>>, vector<1x128x128xbf16>
    %2 = vector.shape_cast %1 : vector<1x128x128xbf16> to vector<128x128xbf16>
    %cst = arith.constant dense<0.000000e+00> : vector<16x128xf32>
    %3 = tpu.matmul %0, %2, %cst {dimension_numbers = #tpu.dot_dimension_numbers<[1], [0], [0], [1], [0, 0, 1, 1], [], []>} : vector<16x128xbf16>, vector<128x128xbf16>, vector<16x128xf32> -> vector<16x128xf32>
    %4 = arith.truncf %3 : vector<16x128xf32> to vector<16x128xbf16>
    %c0_4 = arith.constant 0 : index
    %c0_5 = arith.constant 0 : index
    %c0_6 = arith.constant 0 : index
    %5 = vector.load %arg3[%c0_4, %c0_5, %c0_6] : memref<6x1x128xbf16, #tpu.memory_space<vmem>>, vector<1x1x128xbf16>
    %6 = vector.shape_cast %5 : vector<1x1x128xbf16> to vector<1x128xbf16>
    %7 = vector.broadcast %6 : vector<1x128xbf16> to vector<16x128xbf16>
    %8 = arith.addf %4, %7 : vector<16x128xbf16>
    %cst_7 = arith.constant 0.000000e+00 : bf16
    %9 = vector.broadcast %cst_7 : bf16 to vector<16x128xbf16>
    %10 = arith.maximumf %8, %9 : vector<16x128xbf16>
    %c1 = arith.constant 1 : index
    %c0_8 = arith.constant 0 : index
    %c0_9 = arith.constant 0 : index
    %11 = vector.load %arg2[%c1, %c0_8, %c0_9] : memref<6x128x128xbf16, #tpu.memory_space<vmem>>, vector<1x128x128xbf16>
    %12 = vector.shape_cast %11 : vector<1x128x128xbf16> to vector<128x128xbf16>
    %cst_10 = arith.constant dense<0.000000e+00> : vector<16x128xf32>
    %13 = tpu.matmul %10, %12, %cst_10 {dimension_numbers = #tpu.dot_dimension_numbers<[1], [0], [0], [1], [0, 0, 1, 1], [], []>} : vector<16x128xbf16>, vector<128x128xbf16>, vector<16x128xf32> -> vector<16x128xf32>
    %14 = arith.truncf %13 : vector<16x128xf32> to vector<16x128xbf16>
    %c1_11 = arith.constant 1 : index
    %c0_12 = arith.constant 0 : index
    %c0_13 = arith.constant 0 : index
    %15 = vector.load %arg3[%c1_11, %c0_12, %c0_13] : memref<6x1x128xbf16, #tpu.memory_space<vmem>>, vector<1x1x128xbf16>
    %16 = vector.shape_cast %15 : vector<1x1x128xbf16> to vector<1x128xbf16>
    %17 = vector.broadcast %16 : vector<1x128xbf16> to vector<16x128xbf16>
    %18 = arith.addf %14, %17 : vector<16x128xbf16>
    %cst_14 = arith.constant 0.000000e+00 : bf16
    %19 = vector.broadcast %cst_14 : bf16 to vector<16x128xbf16>
    %20 = arith.maximumf %18, %19 : vector<16x128xbf16>
    %c2 = arith.constant 2 : index
    %c0_15 = arith.constant 0 : index
    %c0_16 = arith.constant 0 : index
    %21 = vector.load %arg2[%c2, %c0_15, %c0_16] : memref<6x128x128xbf16, #tpu.memory_space<vmem>>, vector<1x128x128xbf16>
    %22 = vector.shape_cast %21 : vector<1x128x128xbf16> to vector<128x128xbf16>
    %cst_17 = arith.constant dense<0.000000e+00> : vector<16x128xf32>
    %23 = tpu.matmul %20, %22, %cst_17 {dimension_numbers = #tpu.dot_dimension_numbers<[1], [0], [0], [1], [0, 0, 1, 1], [], []>} : vector<16x128xbf16>, vector<128x128xbf16>, vector<16x128xf32> -> vector<16x128xf32>
    %24 = arith.truncf %23 : vector<16x128xf32> to vector<16x128xbf16>
    %c2_18 = arith.constant 2 : index
    %c0_19 = arith.constant 0 : index
    %c0_20 = arith.constant 0 : index
    %25 = vector.load %arg3[%c2_18, %c0_19, %c0_20] : memref<6x1x128xbf16, #tpu.memory_space<vmem>>, vector<1x1x128xbf16>
    %26 = vector.shape_cast %25 : vector<1x1x128xbf16> to vector<1x128xbf16>
    %27 = vector.broadcast %26 : vector<1x128xbf16> to vector<16x128xbf16>
    %28 = arith.addf %24, %27 : vector<16x128xbf16>
    %cst_21 = arith.constant 0.000000e+00 : bf16
    %29 = vector.broadcast %cst_21 : bf16 to vector<16x128xbf16>
    %30 = arith.maximumf %28, %29 : vector<16x128xbf16>
    %31 = arith.addf %10, %30 : vector<16x128xbf16>
    %c3 = arith.constant 3 : index
    %c0_22 = arith.constant 0 : index
    %c0_23 = arith.constant 0 : index
    %32 = vector.load %arg2[%c3, %c0_22, %c0_23] : memref<6x128x128xbf16, #tpu.memory_space<vmem>>, vector<1x128x128xbf16>
    %33 = vector.shape_cast %32 : vector<1x128x128xbf16> to vector<128x128xbf16>
    %cst_24 = arith.constant dense<0.000000e+00> : vector<16x128xf32>
    %34 = tpu.matmul %31, %33, %cst_24 {dimension_numbers = #tpu.dot_dimension_numbers<[1], [0], [0], [1], [0, 0, 1, 1], [], []>} : vector<16x128xbf16>, vector<128x128xbf16>, vector<16x128xf32> -> vector<16x128xf32>
    %35 = arith.truncf %34 : vector<16x128xf32> to vector<16x128xbf16>
    %c3_25 = arith.constant 3 : index
    %c0_26 = arith.constant 0 : index
    %c0_27 = arith.constant 0 : index
    %36 = vector.load %arg3[%c3_25, %c0_26, %c0_27] : memref<6x1x128xbf16, #tpu.memory_space<vmem>>, vector<1x1x128xbf16>
    %37 = vector.shape_cast %36 : vector<1x1x128xbf16> to vector<1x128xbf16>
    %38 = vector.broadcast %37 : vector<1x128xbf16> to vector<16x128xbf16>
    %39 = arith.addf %35, %38 : vector<16x128xbf16>
    %cst_28 = arith.constant 0.000000e+00 : bf16
    %40 = vector.broadcast %cst_28 : bf16 to vector<16x128xbf16>
    %41 = arith.maximumf %39, %40 : vector<16x128xbf16>
    %c4 = arith.constant 4 : index
    %c0_29 = arith.constant 0 : index
    %c0_30 = arith.constant 0 : index
    %42 = vector.load %arg2[%c4, %c0_29, %c0_30] : memref<6x128x128xbf16, #tpu.memory_space<vmem>>, vector<1x128x128xbf16>
    %43 = vector.shape_cast %42 : vector<1x128x128xbf16> to vector<128x128xbf16>
    %cst_31 = arith.constant dense<0.000000e+00> : vector<16x128xf32>
    %44 = tpu.matmul %41, %43, %cst_31 {dimension_numbers = #tpu.dot_dimension_numbers<[1], [0], [0], [1], [0, 0, 1, 1], [], []>} : vector<16x128xbf16>, vector<128x128xbf16>, vector<16x128xf32> -> vector<16x128xf32>
    %45 = arith.truncf %44 : vector<16x128xf32> to vector<16x128xbf16>
    %c4_32 = arith.constant 4 : index
    %c0_33 = arith.constant 0 : index
    %c0_34 = arith.constant 0 : index
    %46 = vector.load %arg3[%c4_32, %c0_33, %c0_34] : memref<6x1x128xbf16, #tpu.memory_space<vmem>>, vector<1x1x128xbf16>
    %47 = vector.shape_cast %46 : vector<1x1x128xbf16> to vector<1x128xbf16>
    %48 = vector.broadcast %47 : vector<1x128xbf16> to vector<16x128xbf16>
    %49 = arith.addf %45, %48 : vector<16x128xbf16>
    %cst_35 = arith.constant 0.000000e+00 : bf16
    %50 = vector.broadcast %cst_35 : bf16 to vector<16x128xbf16>
    %51 = arith.maximumf %49, %50 : vector<16x128xbf16>
    %52 = arith.addf %31, %51 : vector<16x128xbf16>
    %c5 = arith.constant 5 : index
    %c0_36 = arith.constant 0 : index
    %c0_37 = arith.constant 0 : index
    %53 = vector.load %arg2[%c5, %c0_36, %c0_37] : memref<6x128x128xbf16, #tpu.memory_space<vmem>>, vector<1x128x128xbf16>
    %54 = vector.shape_cast %53 : vector<1x128x128xbf16> to vector<128x128xbf16>
    %cst_38 = arith.constant dense<0.000000e+00> : vector<16x128xf32>
    %55 = tpu.matmul %52, %54, %cst_38 {dimension_numbers = #tpu.dot_dimension_numbers<[1], [0], [0], [1], [0, 0, 1, 1], [], []>} : vector<16x128xbf16>, vector<128x128xbf16>, vector<16x128xf32> -> vector<16x128xf32>
    %56 = arith.truncf %55 : vector<16x128xf32> to vector<16x128xbf16>
    %c5_39 = arith.constant 5 : index
    %c0_40 = arith.constant 0 : index
    %c0_41 = arith.constant 0 : index
    %57 = vector.load %arg3[%c5_39, %c0_40, %c0_41] : memref<6x1x128xbf16, #tpu.memory_space<vmem>>, vector<1x1x128xbf16>
    %58 = vector.shape_cast %57 : vector<1x1x128xbf16> to vector<1x128xbf16>
    %59 = vector.broadcast %58 : vector<1x128xbf16> to vector<16x128xbf16>
    %60 = arith.addf %56, %59 : vector<16x128xbf16>
    %c0_42 = arith.constant 0 : index
    %c0_43 = arith.constant 0 : index
    %61 = vector.load %arg4[%c0_42, %c0_43] : memref<16x128xbf16, #tpu.memory_space<vmem>>, vector<16x128xbf16>
    tpu.vector_store %arg4[%c0_42, %c0_43], %60 {strides = array<i32>} : memref<16x128xbf16, #tpu.memory_space<vmem>>, vector<16x128xbf16>,
    return
  }
  func.func @transform_0(%arg0: i32) -> (i32, i32) {
    %c0_i32 = arith.constant 0 : i32
    %c0_i32_0 = arith.constant 0 : i32
    return %arg0, %c0_i32 : i32, i32
  }
  func.func @transform_1(%arg0: i32) -> (i32, i32, i32) {
    %c0_i32 = arith.constant 0 : i32
    %c0_i32_0 = arith.constant 0 : i32
    %c0_i32_1 = arith.constant 0 : i32
    %c0_i32_2 = arith.constant 0 : i32
    return %c0_i32, %c0_i32_0, %c0_i32_1 : i32, i32, i32
  }
  func.func @transform_2(%arg0: i32) -> (i32, i32, i32) {
    %c0_i32 = arith.constant 0 : i32
    %c0_i32_0 = arith.constant 0 : i32
    %c0_i32_1 = arith.constant 0 : i32
    %c0_i32_2 = arith.constant 0 : i32
    return %c0_i32, %c0_i32_0, %c0_i32_1 : i32, i32, i32
  }
  func.func @transform_3(%arg0: i32) -> (i32, i32) {
    %c0_i32 = arith.constant 0 : i32
    %c0_i32_0 = arith.constant 0 : i32
    return %arg0, %c0_i32 : i32, i32
  }
}

</mosaic_0001>

<llo_original>
// kernel: forward.1
$region0: #{forward.1}
  #allocation0 [shape = 'u32[]', space=smem, size = 0x4, offset = 0x4, fixed_abs, tag = 'smem constant byte address 0x4 - core index']
  #allocation1 [shape = 'u32[144,128]{1,0:T(1,128)}', space=vmem, size = 0x12000, scoped, tag = 'internal scratch']
  %s0 = inlined_call_operand.vmem [shape: bf16[16,128], index: 0, kind: input, shape index: {}]
  %s1 = inlined_call_operand.hbm [shape: bf16[6,128,128], index: 1, kind: input, shape index: {}]
  %s2 = inlined_call_operand.vmem [shape: bf16[6,1,128], index: 2, kind: input, shape index: {}]
  %s3 = inlined_call_operand.vmem [shape: bf16[16,128], index: 3, kind: output, shape index: {}]
  %s4 = sld [smem:[#allocation0]]
  $region26: #{forward.1} parent=0
    _
  %s6 = ssub.s32 1, %s4
  %s7 = scalar_select 0, %s6, %s4
  $region1: #{forward.1} parent=0
    #allocation2 [shape = 'u8[196608]{0}', space=vmem, size = 0x30000, scoped, tag = 'input window, operand 1, single buffered']
    #allocation3 [shape = 's32[1]{0}', space=sflag, size = 0x4, scoped, tag = 'scoped memory for forward.1']
    %8 = vsyncpa [#allocation3], 0
    // Predicated region
    $region2: #{forward.1} parent=1 // pred_check
      _
    $region3: #{forward.1} parent=1 // pred_check_branch
      %10 = sbr.rel (0) target = $region5
    $region4: #{forward.1} parent=1 // pred_region
      _
    $region5: #{forward.1} parent=1 // pred_fallthru
      _
    // Predicated region
    $region6: #{forward.1} parent=1 // pred_check
      _
    $region7: #{forward.1} parent=1 // pred_check_branch
      %12 = sbr.rel (0) target = $region9
    $region8: #{forward.1} parent=1 // pred_region
      %s14 = ssub.s32 6144, 6144
      %15 = vsyncadd [#allocation3], %s14
      %s16 = sshll.u32 [#allocation2], 4
      %s17 = int_to_ptr.vmem [resolvable:$true] %s16
      %22 = dma.hbm_to_vmem [thread:$0]  %s1, 6144, %s17, [#allocation3], 64, 64, 4
    $region9: #{forward.1} parent=1 // pred_fallthru
      _
    // Predicated region
    $region10: #{forward.1} parent=1 // pred_check
      _
    $region11: #{forward.1} parent=1 // pred_check_branch
      %24 = sbr.rel (0) target = $region13
    $region12: #{forward.1} parent=1 // pred_region
      _
    $region13: #{forward.1} parent=1 // pred_fallthru
      _
    // Predicated region
    $region14: #{forward.1} parent=1 // pred_check
      _
    $region15: #{forward.1} parent=1 // pred_check_branch
      %26 = sbr.rel (0) target = $region17
    $region16: #{forward.1} parent=1 // pred_region
      %27 = dma.done [#allocation3], 6144
    $region17: #{forward.1} parent=1 // pred_fallthru
      _
    %v29 = vld [vmem:[%s0] sm:$0xf]
    %v30 = vld [vmem:[%s0 + $0x4] sm:$0xf]
    %v31 = vld [vmem:[#allocation2] sm:$0xf]
    %v32 = vld [vmem:[#allocation2 + $0x4] sm:$0xf]
    %v33 = vld [vmem:[#allocation2 + $0x8] sm:$0xf]
    %v34 = vld [vmem:[#allocation2 + $0xc] sm:$0xf]
    %v35 = vld [vmem:[#allocation2 + $0x10] sm:$0xf]
    %v36 = vld [vmem:[#allocation2 + $0x14] sm:$0xf]
    %v37 = vld [vmem:[#allocation2 + $0x18] sm:$0xf]
    %v38 = vld [vmem:[#allocation2 + $0x1c] sm:$0xf]
    %v39 = vld [vmem:[#allocation2 + $0x20] sm:$0xf]
    %v40 = vld [vmem:[#allocation2 + $0x24] sm:$0xf]
    %v41 = vld [vmem:[#allocation2 + $0x28] sm:$0xf]
    %v42 = vld [vmem:[#allocation2 + $0x2c] sm:$0xf]
    %v43 = vld [vmem:[#allocation2 + $0x30] sm:$0xf]
    %v44 = vld [vmem:[#allocation2 + $0x34] sm:$0xf]
    %v45 = vld [vmem:[#allocation2 + $0x38] sm:$0xf]
    %v46 = vld [vmem:[#allocation2 + $0x3c] sm:$0xf]
    %v49 = vunpack.c.l.b16 %v29
    %v50 = vunpack.c.l.b16 %v30
    %v51 = vpack.c.b16 %v50, %v49
    %v69 = vunpack.c.l.b16 %v31
    %v70 = vunpack.c.l.b16 %v32
    %v71 = vunpack.c.l.b16 %v33
    %v72 = vunpack.c.l.b16 %v34
    %v73 = vunpack.c.l.b16 %v35
    %v74 = vunpack.c.l.b16 %v36
    %v75 = vunpack.c.l.b16 %v37
    %v76 = vunpack.c.l.b16 %v38
    %v77 = vunpack.c.l.b16 %v39
    %v78 = vunpack.c.l.b16 %v40
    %v79 = vunpack.c.l.b16 %v41
    %v80 = vunpack.c.l.b16 %v42
    %v81 = vunpack.c.l.b16 %v43
    %v82 = vunpack.c.l.b16 %v44
    %v83 = vunpack.c.l.b16 %v45
    %v84 = vunpack.c.l.b16 %v46
    %v85 = vpack.c.b16 %v70, %v69
    %v86 = vpack.c.b16 %v72, %v71
    %v87 = vpack.c.b16 %v74, %v73
    %v88 = vpack.c.b16 %v76, %v75
    %v89 = vpack.c.b16 %v78, %v77
    %v90 = vpack.c.b16 %v80, %v79
    %v91 = vpack.c.b16 %v82, %v81
    %v92 = vpack.c.b16 %v84, %v83
    %101 = vmatprep.subr.bf16.mxu0 0
    %102 = vmatpush1.bf16.msra.mxu0 %v85
    %103 = vmatprep.subr.bf16.mxu0 0
    %104 = vmatpush1.bf16.msra.mxu0 %v86
    %105 = vmatprep.subr.bf16.mxu0 0
    %106 = vmatpush1.bf16.msra.mxu0 %v87
    %107 = vmatprep.subr.bf16.mxu0 0
    %108 = vmatpush1.bf16.msra.mxu0 %v88
    %109 = vmatprep.subr.bf16.mxu0 0
    %110 = vmatpush1.bf16.msra.mxu0 %v89
    %111 = vmatprep.subr.bf16.mxu0 0
    %112 = vmatpush1.bf16.msra.mxu0 %v90
    %113 = vmatprep.subr.bf16.mxu0 0
    %114 = vmatpush1.bf16.msra.mxu0 %v91
    %115 = vmatprep.subr.bf16.mxu0 0
    %116 = vmatpush1.bf16.msra.mxu0 %v92
    %117 = vmatprep.subr.bf16.mxu0 0
    %118 = vmatpush1.bf16.msra.mxu0 0
    %119 = vmatprep.subr.bf16.mxu0 0
    %120 = vmatpush1.bf16.msra.mxu0 0
    %121 = vmatprep.subr.bf16.mxu0 0
    %122 = vmatpush1.bf16.msra.mxu0 0
    %123 = vmatprep.subr.bf16.mxu0 0
    %124 = vmatpush1.bf16.msra.mxu0 0
    %125 = vmatprep.subr.bf16.mxu0 0
    %126 = vmatpush1.bf16.msra.mxu0 0
    %127 = vmatprep.subr.bf16.mxu0 0
    %128 = vmatpush1.bf16.msra.mxu0 0
    %129 = vmatprep.subr.bf16.mxu0 0
    %130 = vmatpush1.bf16.msra.mxu0 0
    %131 = vmatprep.subr.bf16.mxu0 0
    %132 = vmatpush1.bf16.msra.mxu0 0
    %133 = vmatprep.mubr.bf16.mxu0 0
    %134 = vmatmul.mubr.bf16.gmra.mrb[0].mxu0 %v51
    %v135 = vpop.f32.mrb[0].mxu0
    %v136 = vadd.f32 0.0, %v135
    %v137 = vpop.f32.mrb[0].mxu0
    %v138 = vpop.f32.mrb[0].mxu0
    %v139 = vadd.f32 0.0, %v138
    %v140 = vpop.f32.mrb[0].mxu0
    %141 = vdwg.mxu0
    %v142 = vpack.c.bf16 %v139, %v136
    %v143 = vld [vmem:[%s2] sm:$0x1]
    %v145 = vpack.i.b16 %v143, %v143
    %v147 = vlaneseq
    %v148 = vshrl.u32 %v147, 7
    %v149 = vsub.s32 0, %v148
    %v150 = vrot.slane %v145, %v149
    %v151 = vadd.bf16 %v142, %v150
    %v152 = vmax.bf16 %v151, 0
    %s153 = scalar_lea.vmem [#allocation2], 64
    %v154 = vld [vmem:[%s153] sm:$0xf]
    %v155 = vld [vmem:[%s153 + $0x4] sm:$0xf]
    %v156 = vld [vmem:[%s153 + $0x8] sm:$0xf]
    %v157 = vld [vmem:[%s153 + $0xc] sm:$0xf]
    %v158 = vld [vmem:[%s153 + $0x10] sm:$0xf]
    %v159 = vld [vmem:[%s153 + $0x14] sm:$0xf]
    %v160 = vld [vmem:[%s153 + $0x18] sm:$0xf]
    %v161 = vld [vmem:[%s153 + $0x1c] sm:$0xf]
    %v162 = vld [vmem:[%s153 + $0x20] sm:$0xf]
    %v163 = vld [vmem:[%s153 + $0x24] sm:$0xf]
    %v164 = vld [vmem:[%s153 + $0x28] sm:$0xf]
    %v165 = vld [vmem:[%s153 + $0x2c] sm:$0xf]
    %v166 = vld [vmem:[%s153 + $0x30] sm:$0xf]
    %v167 = vld [vmem:[%s153 + $0x34] sm:$0xf]
    %v168 = vld [vmem:[%s153 + $0x38] sm:$0xf]
    %v169 = vld [vmem:[%s153 + $0x3c] sm:$0xf]
    %v186 = vunpack.c.l.b16 %v154
    %v187 = vunpack.c.l.b16 %v155
    %v188 = vunpack.c.l.b16 %v156
    %v189 = vunpack.c.l.b16 %v157
    %v190 = vunpack.c.l.b16 %v158
    %v191 = vunpack.c.l.b16 %v159
    %v192 = vunpack.c.l.b16 %v160
    %v193 = vunpack.c.l.b16 %v161
    %v194 = vunpack.c.l.b16 %v162
    %v195 = vunpack.c.l.b16 %v163
    %v196 = vunpack.c.l.b16 %v164
    %v197 = vunpack.c.l.b16 %v165
    %v198 = vunpack.c.l.b16 %v166
    %v199 = vunpack.c.l.b16 %v167
    %v200 = vunpack.c.l.b16 %v168
    %v201 = vunpack.c.l.b16 %v169
    %v202 = vpack.c.b16 %v187, %v186
    %v203 = vpack.c.b16 %v189, %v188
    %v204 = vpack.c.b16 %v191, %v190
    %v205 = vpack.c.b16 %v193, %v192
    %v206 = vpack.c.b16 %v195, %v194
    %v207 = vpack.c.b16 %v197, %v196
    %v208 = vpack.c.b16 %v199, %v198
    %v209 = vpack.c.b16 %v201, %v200
    %218 = vmatprep.subr.bf16.mxu0 0
    %219 = vmatpush1.bf16.msra.mxu0 %v202
    %220 = vmatprep.subr.bf16.mxu0 0
    %221 = vmatpush1.bf16.msra.mxu0 %v203
    %222 = vmatprep.subr.bf16.mxu0 0
    %223 = vmatpush1.bf16.msra.mxu0 %v204
    %224 = vmatprep.subr.bf16.mxu0 0
    %225 = vmatpush1.bf16.msra.mxu0 %v205
    %226 = vmatprep.subr.bf16.mxu0 0
    %227 = vmatpush1.bf16.msra.mxu0 %v206
    %228 = vmatprep.subr.bf16.mxu0 0
    %229 = vmatpush1.bf16.msra.mxu0 %v207
    %230 = vmatprep.subr.bf16.mxu0 0
    %231 = vmatpush1.bf16.msra.mxu0 %v208
    %232 = vmatprep.subr.bf16.mxu0 0
    %233 = vmatpush1.bf16.msra.mxu0 %v209
    %234 = vmatprep.subr.bf16.mxu0 0
    %235 = vmatpush1.bf16.msra.mxu0 0
    %236 = vmatprep.subr.bf16.mxu0 0
    %237 = vmatpush1.bf16.msra.mxu0 0
    %238 = vmatprep.subr.bf16.mxu0 0
    %239 = vmatpush1.bf16.msra.mxu0 0
    %240 = vmatprep.subr.bf16.mxu0 0
    %241 = vmatpush1.bf16.msra.mxu0 0
    %242 = vmatprep.subr.bf16.mxu0 0
    %243 = vmatpush1.bf16.msra.mxu0 0
    %244 = vmatprep.subr.bf16.mxu0 0
    %245 = vmatpush1.bf16.msra.mxu0 0
    %246 = vmatprep.subr.bf16.mxu0 0
    %247 = vmatpush1.bf16.msra.mxu0 0
    %248 = vmatprep.subr.bf16.mxu0 0
    %249 = vmatpush1.bf16.msra.mxu0 0
    %250 = vmatprep.mubr.bf16.mxu0 0
    %251 = vmatmul.mubr.bf16.gmra.mrb[0].mxu0 %v152
    %v252 = vpop.f32.mrb[0].mxu0
    %v253 = vadd.f32 0.0, %v252
    %v254 = vpop.f32.mrb[0].mxu0
    %v255 = vpop.f32.mrb[0].mxu0
    %v256 = vadd.f32 0.0, %v255
    %v257 = vpop.f32.mrb[0].mxu0
    %258 = vdwg.mxu0
    %v259 = vpack.c.bf16 %v256, %v253
    %s260 = scalar_lea.vmem %s2, 1
    %v261 = vld [vmem:[%s260] sm:$0x1]
    %v263 = vpack.i.b16 %v261, %v261
    %v265 = vlaneseq
    %v266 = vshrl.u32 %v265, 7
    %v267 = vsub.s32 0, %v266
    %v268 = vrot.slane %v263, %v267
    %v269 = vadd.bf16 %v259, %v268
    %v270 = vmax.bf16 %v269, 0
    %s271 = scalar_lea.vmem [#allocation2], 128
    %v272 = vld [vmem:[%s271] sm:$0xf]
    %v273 = vld [vmem:[%s271 + $0x4] sm:$0xf]
    %v274 = vld [vmem:[%s271 + $0x8] sm:$0xf]
    %v275 = vld [vmem:[%s271 + $0xc] sm:$0xf]
    %v276 = vld [vmem:[%s271 + $0x10] sm:$0xf]
    %v277 = vld [vmem:[%s271 + $0x14] sm:$0xf]
    %v278 = vld [vmem:[%s271 + $0x18] sm:$0xf]
    %v279 = vld [vmem:[%s271 + $0x1c] sm:$0xf]
    %v280 = vld [vmem:[%s271 + $0x20] sm:$0xf]
    %v281 = vld [vmem:[%s271 + $0x24] sm:$0xf]
    %v282 = vld [vmem:[%s271 + $0x28] sm:$0xf]
    %v283 = vld [vmem:[%s271 + $0x2c] sm:$0xf]
    %v284 = vld [vmem:[%s271 + $0x30] sm:$0xf]
    %v285 = vld [vmem:[%s271 + $0x34] sm:$0xf]
    %v286 = vld [vmem:[%s271 + $0x38] sm:$0xf]
    %v287 = vld [vmem:[%s271 + $0x3c] sm:$0xf]
    %v304 = vunpack.c.l.b16 %v272
    %v305 = vunpack.c.l.b16 %v273
    %v306 = vunpack.c.l.b16 %v274
    %v307 = vunpack.c.l.b16 %v275
    %v308 = vunpack.c.l.b16 %v276
    %v309 = vunpack.c.l.b16 %v277
    %v310 = vunpack.c.l.b16 %v278
    %v311 = vunpack.c.l.b16 %v279
    %v312 = vunpack.c.l.b16 %v280
    %v313 = vunpack.c.l.b16 %v281
    %v314 = vunpack.c.l.b16 %v282
    %v315 = vunpack.c.l.b16 %v283
    %v316 = vunpack.c.l.b16 %v284
    %v317 = vunpack.c.l.b16 %v285
    %v318 = vunpack.c.l.b16 %v286
    %v319 = vunpack.c.l.b16 %v287
    %v320 = vpack.c.b16 %v305, %v304
    %v321 = vpack.c.b16 %v307, %v306
    %v322 = vpack.c.b16 %v309, %v308
    %v323 = vpack.c.b16 %v311, %v310
    %v324 = vpack.c.b16 %v313, %v312
    %v325 = vpack.c.b16 %v315, %v314
    %v326 = vpack.c.b16 %v317, %v316
    %v327 = vpack.c.b16 %v319, %v318
    %336 = vmatprep.subr.bf16.mxu0 0
    %337 = vmatpush1.bf16.msra.mxu0 %v320
    %338 = vmatprep.subr.bf16.mxu0 0
    %339 = vmatpush1.bf16.msra.mxu0 %v321
    %340 = vmatprep.subr.bf16.mxu0 0
    %341 = vmatpush1.bf16.msra.mxu0 %v322
    %342 = vmatprep.subr.bf16.mxu0 0
    %343 = vmatpush1.bf16.msra.mxu0 %v323
    %344 = vmatprep.subr.bf16.mxu0 0
    %345 = vmatpush1.bf16.msra.mxu0 %v324
    %346 = vmatprep.subr.bf16.mxu0 0
    %347 = vmatpush1.bf16.msra.mxu0 %v325
    %348 = vmatprep.subr.bf16.mxu0 0
    %349 = vmatpush1.bf16.msra.mxu0 %v326
    %350 = vmatprep.subr.bf16.mxu0 0
    %351 = vmatpush1.bf16.msra.mxu0 %v327
    %352 = vmatprep.subr.bf16.mxu0 0
    %353 = vmatpush1.bf16.msra.mxu0 0
    %354 = vmatprep.subr.bf16.mxu0 0
    %355 = vmatpush1.bf16.msra.mxu0 0
    %356 = vmatprep.subr.bf16.mxu0 0
    %357 = vmatpush1.bf16.msra.mxu0 0
    %358 = vmatprep.subr.bf16.mxu0 0
    %359 = vmatpush1.bf16.msra.mxu0 0
    %360 = vmatprep.subr.bf16.mxu0 0
    %361 = vmatpush1.bf16.msra.mxu0 0
    %362 = vmatprep.subr.bf16.mxu0 0
    %363 = vmatpush1.bf16.msra.mxu0 0
    %364 = vmatprep.subr.bf16.mxu0 0
    %365 = vmatpush1.bf16.msra.mxu0 0
    %366 = vmatprep.subr.bf16.mxu0 0
    %367 = vmatpush1.bf16.msra.mxu0 0
    %368 = vmatprep.mubr.bf16.mxu0 0
    %369 = vmatmul.mubr.bf16.gmra.mrb[0].mxu0 %v270
    %v370 = vpop.f32.mrb[0].mxu0
    %v371 = vadd.f32 0.0, %v370
    %v372 = vpop.f32.mrb[0].mxu0
    %v373 = vpop.f32.mrb[0].mxu0
    %v374 = vadd.f32 0.0, %v373
    %v375 = vpop.f32.mrb[0].mxu0
    %376 = vdwg.mxu0
    %v377 = vpack.c.bf16 %v374, %v371
    %s378 = scalar_lea.vmem %s2, 2
    %v379 = vld [vmem:[%s378] sm:$0x1]
    %v381 = vpack.i.b16 %v379, %v379
    %v383 = vlaneseq
    %v384 = vshrl.u32 %v383, 7
    %v385 = vsub.s32 0, %v384
    %v386 = vrot.slane %v381, %v385
    %v387 = vadd.bf16 %v377, %v386
    %v388 = vmax.bf16 %v387, 0
    %v389 = vadd.bf16 %v152, %v388
    %s390 = scalar_lea.vmem [#allocation2], 192
    %v391 = vld [vmem:[%s390] sm:$0xf]
    %v392 = vld [vmem:[%s390 + $0x4] sm:$0xf]
    %v393 = vld [vmem:[%s390 + $0x8] sm:$0xf]
    %v394 = vld [vmem:[%s390 + $0xc] sm:$0xf]
    %v395 = vld [vmem:[%s390 + $0x10] sm:$0xf]
    %v396 = vld [vmem:[%s390 + $0x14] sm:$0xf]
    %v397 = vld [vmem:[%s390 + $0x18] sm:$0xf]
    %v398 = vld [vmem:[%s390 + $0x1c] sm:$0xf]
    %v399 = vld [vmem:[%s390 + $0x20] sm:$0xf]
    %v400 = vld [vmem:[%s390 + $0x24] sm:$0xf]
    %v401 = vld [vmem:[%s390 + $0x28] sm:$0xf]
    %v402 = vld [vmem:[%s390 + $0x2c] sm:$0xf]
    %v403 = vld [vmem:[%s390 + $0x30] sm:$0xf]
    %v404 = vld [vmem:[%s390 + $0x34] sm:$0xf]
    %v405 = vld [vmem:[%s390 + $0x38] sm:$0xf]
    %v406 = vld [vmem:[%s390 + $0x3c] sm:$0xf]
    %v423 = vunpack.c.l.b16 %v391
    %v424 = vunpack.c.l.b16 %v392
    %v425 = vunpack.c.l.b16 %v393
    %v426 = vunpack.c.l.b16 %v394
    %v427 = vunpack.c.l.b16 %v395
    %v428 = vunpack.c.l.b16 %v396
    %v429 = vunpack.c.l.b16 %v397
    %v430 = vunpack.c.l.b16 %v398
    %v431 = vunpack.c.l.b16 %v399
    %v432 = vunpack.c.l.b16 %v400
    %v433 = vunpack.c.l.b16 %v401
    %v434 = vunpack.c.l.b16 %v402
    %v435 = vunpack.c.l.b16 %v403
    %v436 = vunpack.c.l.b16 %v404
    %v437 = vunpack.c.l.b16 %v405
    %v438 = vunpack.c.l.b16 %v406
    %v439 = vpack.c.b16 %v424, %v423
    %v440 = vpack.c.b16 %v426, %v425
    %v441 = vpack.c.b16 %v428, %v427
    %v442 = vpack.c.b16 %v430, %v429
    %v443 = vpack.c.b16 %v432, %v431
    %v444 = vpack.c.b16 %v434, %v433
    %v445 = vpack.c.b16 %v436, %v435
    %v446 = vpack.c.b16 %v438, %v437
    %455 = vmatprep.subr.bf16.mxu0 0
    %456 = vmatpush1.bf16.msra.mxu0 %v439
    %457 = vmatprep.subr.bf16.mxu0 0
    %458 = vmatpush1.bf16.msra.mxu0 %v440
    %459 = vmatprep.subr.bf16.mxu0 0
    %460 = vmatpush1.bf16.msra.mxu0 %v441
    %461 = vmatprep.subr.bf16.mxu0 0
    %462 = vmatpush1.bf16.msra.mxu0 %v442
    %463 = vmatprep.subr.bf16.mxu0 0
    %464 = vmatpush1.bf16.msra.mxu0 %v443
    %465 = vmatprep.subr.bf16.mxu0 0
    %466 = vmatpush1.bf16.msra.mxu0 %v444
    %467 = vmatprep.subr.bf16.mxu0 0
    %468 = vmatpush1.bf16.msra.mxu0 %v445
    %469 = vmatprep.subr.bf16.mxu0 0
    %470 = vmatpush1.bf16.msra.mxu0 %v446
    %471 = vmatprep.subr.bf16.mxu0 0
    %472 = vmatpush1.bf16.msra.mxu0 0
    %473 = vmatprep.subr.bf16.mxu0 0
    %474 = vmatpush1.bf16.msra.mxu0 0
    %475 = vmatprep.subr.bf16.mxu0 0
    %476 = vmatpush1.bf16.msra.mxu0 0
    %477 = vmatprep.subr.bf16.mxu0 0
    %478 = vmatpush1.bf16.msra.mxu0 0
    %479 = vmatprep.subr.bf16.mxu0 0
    %480 = vmatpush1.bf16.msra.mxu0 0
    %481 = vmatprep.subr.bf16.mxu0 0
    %482 = vmatpush1.bf16.msra.mxu0 0
    %483 = vmatprep.subr.bf16.mxu0 0
    %484 = vmatpush1.bf16.msra.mxu0 0
    %485 = vmatprep.subr.bf16.mxu0 0
    %486 = vmatpush1.bf16.msra.mxu0 0
    %487 = vmatprep.mubr.bf16.mxu0 0
    %488 = vmatmul.mubr.bf16.gmra.mrb[0].mxu0 %v389
    %v489 = vpop.f32.mrb[0].mxu0
    %v490 = vadd.f32 0.0, %v489
    %v491 = vpop.f32.mrb[0].mxu0
    %v492 = vpop.f32.mrb[0].mxu0
    %v493 = vadd.f32 0.0, %v492
    %v494 = vpop.f32.mrb[0].mxu0
    %495 = vdwg.mxu0
    %v496 = vpack.c.bf16 %v493, %v490
    %s497 = scalar_lea.vmem %s2, 3
    %v498 = vld [vmem:[%s497] sm:$0x1]
    %v500 = vpack.i.b16 %v498, %v498
    %v502 = vlaneseq
    %v503 = vshrl.u32 %v502, 7
    %v504 = vsub.s32 0, %v503
    %v505 = vrot.slane %v500, %v504
    %v506 = vadd.bf16 %v496, %v505
    %v507 = vmax.bf16 %v506, 0
    %s508 = scalar_lea.vmem [#allocation2], 256
    %v509 = vld [vmem:[%s508] sm:$0xf]
    %v510 = vld [vmem:[%s508 + $0x4] sm:$0xf]
    %v511 = vld [vmem:[%s508 + $0x8] sm:$0xf]
    %v512 = vld [vmem:[%s508 + $0xc] sm:$0xf]
    %v513 = vld [vmem:[%s508 + $0x10] sm:$0xf]
    %v514 = vld [vmem:[%s508 + $0x14] sm:$0xf]
    %v515 = vld [vmem:[%s508 + $0x18] sm:$0xf]
    %v516 = vld [vmem:[%s508 + $0x1c] sm:$0xf]
    %v517 = vld [vmem:[%s508 + $0x20] sm:$0xf]
    %v518 = vld [vmem:[%s508 + $0x24] sm:$0xf]
    %v519 = vld [vmem:[%s508 + $0x28] sm:$0xf]
    %v520 = vld [vmem:[%s508 + $0x2c] sm:$0xf]
    %v521 = vld [vmem:[%s508 + $0x30] sm:$0xf]
    %v522 = vld [vmem:[%s508 + $0x34] sm:$0xf]
    %v523 = vld [vmem:[%s508 + $0x38] sm:$0xf]
    %v524 = vld [vmem:[%s508 + $0x3c] sm:$0xf]
    %v541 = vunpack.c.l.b16 %v509
    %v542 = vunpack.c.l.b16 %v510
    %v543 = vunpack.c.l.b16 %v511
    %v544 = vunpack.c.l.b16 %v512
    %v545 = vunpack.c.l.b16 %v513
    %v546 = vunpack.c.l.b16 %v514
    %v547 = vunpack.c.l.b16 %v515
    %v548 = vunpack.c.l.b16 %v516
    %v549 = vunpack.c.l.b16 %v517
    %v550 = vunpack.c.l.b16 %v518
    %v551 = vunpack.c.l.b16 %v519
    %v552 = vunpack.c.l.b16 %v520
    %v553 = vunpack.c.l.b16 %v521
    %v554 = vunpack.c.l.b16 %v522
    %v555 = vunpack.c.l.b16 %v523
    %v556 = vunpack.c.l.b16 %v524
    %v557 = vpack.c.b16 %v542, %v541
    %v558 = vpack.c.b16 %v544, %v543
    %v559 = vpack.c.b16 %v546, %v545
    %v560 = vpack.c.b16 %v548, %v547
    %v561 = vpack.c.b16 %v550, %v549
    %v562 = vpack.c.b16 %v552, %v551
    %v563 = vpack.c.b16 %v554, %v553
    %v564 = vpack.c.b16 %v556, %v555
    %573 = vmatprep.subr.bf16.mxu0 0
    %574 = vmatpush1.bf16.msra.mxu0 %v557
    %575 = vmatprep.subr.bf16.mxu0 0
    %576 = vmatpush1.bf16.msra.mxu0 %v558
    %577 = vmatprep.subr.bf16.mxu0 0
    %578 = vmatpush1.bf16.msra.mxu0 %v559
    %579 = vmatprep.subr.bf16.mxu0 0
    %580 = vmatpush1.bf16.msra.mxu0 %v560
    %581 = vmatprep.subr.bf16.mxu0 0
    %582 = vmatpush1.bf16.msra.mxu0 %v561
    %583 = vmatprep.subr.bf16.mxu0 0
    %584 = vmatpush1.bf16.msra.mxu0 %v562
    %585 = vmatprep.subr.bf16.mxu0 0
    %586 = vmatpush1.bf16.msra.mxu0 %v563
    %587 = vmatprep.subr.bf16.mxu0 0
    %588 = vmatpush1.bf16.msra.mxu0 %v564
    %589 = vmatprep.subr.bf16.mxu0 0
    %590 = vmatpush1.bf16.msra.mxu0 0
    %591 = vmatprep.subr.bf16.mxu0 0
    %592 = vmatpush1.bf16.msra.mxu0 0
    %593 = vmatprep.subr.bf16.mxu0 0
    %594 = vmatpush1.bf16.msra.mxu0 0
    %595 = vmatprep.subr.bf16.mxu0 0
    %596 = vmatpush1.bf16.msra.mxu0 0
    %597 = vmatprep.subr.bf16.mxu0 0
    %598 = vmatpush1.bf16.msra.mxu0 0
    %599 = vmatprep.subr.bf16.mxu0 0
    %600 = vmatpush1.bf16.msra.mxu0 0
    %601 = vmatprep.subr.bf16.mxu0 0
    %602 = vmatpush1.bf16.msra.mxu0 0
    %603 = vmatprep.subr.bf16.mxu0 0
    %604 = vmatpush1.bf16.msra.mxu0 0
    %605 = vmatprep.mubr.bf16.mxu0 0
    %606 = vmatmul.mubr.bf16.gmra.mrb[0].mxu0 %v507
    %v607 = vpop.f32.mrb[0].mxu0
    %v608 = vadd.f32 0.0, %v607
    %v609 = vpop.f32.mrb[0].mxu0
    %v610 = vpop.f32.mrb[0].mxu0
    %v611 = vadd.f32 0.0, %v610
    %v612 = vpop.f32.mrb[0].mxu0
    %613 = vdwg.mxu0
    %v614 = vpack.c.bf16 %v611, %v608
    %s615 = scalar_lea.vmem %s2, 4
    %v616 = vld [vmem:[%s615] sm:$0x1]
    %v618 = vpack.i.b16 %v616, %v616
    %v620 = vlaneseq
    %v621 = vshrl.u32 %v620, 7
    %v622 = vsub.s32 0, %v621
    %v623 = vrot.slane %v618, %v622
    %v624 = vadd.bf16 %v614, %v623
    %v625 = vmax.bf16 %v624, 0
    %v626 = vadd.bf16 %v389, %v625
    %s627 = scalar_lea.vmem [#allocation2], 320
    %v628 = vld [vmem:[%s627] sm:$0xf]
    %v629 = vld [vmem:[%s627 + $0x4] sm:$0xf]
    %v630 = vld [vmem:[%s627 + $0x8] sm:$0xf]
    %v631 = vld [vmem:[%s627 + $0xc] sm:$0xf]
    %v632 = vld [vmem:[%s627 + $0x10] sm:$0xf]
    %v633 = vld [vmem:[%s627 + $0x14] sm:$0xf]
    %v634 = vld [vmem:[%s627 + $0x18] sm:$0xf]
    %v635 = vld [vmem:[%s627 + $0x1c] sm:$0xf]
    %v636 = vld [vmem:[%s627 + $0x20] sm:$0xf]
    %v637 = vld [vmem:[%s627 + $0x24] sm:$0xf]
    %v638 = vld [vmem:[%s627 + $0x28] sm:$0xf]
    %v639 = vld [vmem:[%s627 + $0x2c] sm:$0xf]
    %v640 = vld [vmem:[%s627 + $0x30] sm:$0xf]
    %v641 = vld [vmem:[%s627 + $0x34] sm:$0xf]
    %v642 = vld [vmem:[%s627 + $0x38] sm:$0xf]
    %v643 = vld [vmem:[%s627 + $0x3c] sm:$0xf]
    %v660 = vunpack.c.l.b16 %v628
    %v661 = vunpack.c.l.b16 %v629
    %v662 = vunpack.c.l.b16 %v630
    %v663 = vunpack.c.l.b16 %v631
    %v664 = vunpack.c.l.b16 %v632
    %v665 = vunpack.c.l.b16 %v633
    %v666 = vunpack.c.l.b16 %v634
    %v667 = vunpack.c.l.b16 %v635
    %v668 = vunpack.c.l.b16 %v636
    %v669 = vunpack.c.l.b16 %v637
    %v670 = vunpack.c.l.b16 %v638
    %v671 = vunpack.c.l.b16 %v639
    %v672 = vunpack.c.l.b16 %v640
    %v673 = vunpack.c.l.b16 %v641
    %v674 = vunpack.c.l.b16 %v642
    %v675 = vunpack.c.l.b16 %v643
    %v676 = vpack.c.b16 %v661, %v660
    %v677 = vpack.c.b16 %v663, %v662
    %v678 = vpack.c.b16 %v665, %v664
    %v679 = vpack.c.b16 %v667, %v666
    %v680 = vpack.c.b16 %v669, %v668
    %v681 = vpack.c.b16 %v671, %v670
    %v682 = vpack.c.b16 %v673, %v672
    %v683 = vpack.c.b16 %v675, %v674
    %692 = vmatprep.subr.bf16.mxu0 0
    %693 = vmatpush1.bf16.msra.mxu0 %v676
    %694 = vmatprep.subr.bf16.mxu0 0
    %695 = vmatpush1.bf16.msra.mxu0 %v677
    %696 = vmatprep.subr.bf16.mxu0 0
    %697 = vmatpush1.bf16.msra.mxu0 %v678
    %698 = vmatprep.subr.bf16.mxu0 0
    %699 = vmatpush1.bf16.msra.mxu0 %v679
    %700 = vmatprep.subr.bf16.mxu0 0
    %701 = vmatpush1.bf16.msra.mxu0 %v680
    %702 = vmatprep.subr.bf16.mxu0 0
    %703 = vmatpush1.bf16.msra.mxu0 %v681
    %704 = vmatprep.subr.bf16.mxu0 0
    %705 = vmatpush1.bf16.msra.mxu0 %v682
    %706 = vmatprep.subr.bf16.mxu0 0
    %707 = vmatpush1.bf16.msra.mxu0 %v683
    %708 = vmatprep.subr.bf16.mxu0 0
    %709 = vmatpush1.bf16.msra.mxu0 0
    %710 = vmatprep.subr.bf16.mxu0 0
    %711 = vmatpush1.bf16.msra.mxu0 0
    %712 = vmatprep.subr.bf16.mxu0 0
    %713 = vmatpush1.bf16.msra.mxu0 0
    %714 = vmatprep.subr.bf16.mxu0 0
    %715 = vmatpush1.bf16.msra.mxu0 0
    %716 = vmatprep.subr.bf16.mxu0 0
    %717 = vmatpush1.bf16.msra.mxu0 0
    %718 = vmatprep.subr.bf16.mxu0 0
    %719 = vmatpush1.bf16.msra.mxu0 0
    %720 = vmatprep.subr.bf16.mxu0 0
    %721 = vmatpush1.bf16.msra.mxu0 0
    %722 = vmatprep.subr.bf16.mxu0 0
    %723 = vmatpush1.bf16.msra.mxu0 0
    %724 = vmatprep.mubr.bf16.mxu0 0
    %725 = vmatmul.mubr.bf16.gmra.mrb[0].mxu0 %v626
    %v726 = vpop.f32.mrb[0].mxu0
    %v727 = vadd.f32 0.0, %v726
    %v728 = vpop.f32.mrb[0].mxu0
    %v729 = vpop.f32.mrb[0].mxu0
    %v730 = vadd.f32 0.0, %v729
    %v731 = vpop.f32.mrb[0].mxu0
    %732 = vdwg.mxu0
    %v733 = vpack.c.bf16 %v730, %v727
    %s734 = scalar_lea.vmem %s2, 5
    %v735 = vld [vmem:[%s734] sm:$0x1]
    %v737 = vpack.i.b16 %v735, %v735
    %v739 = vlaneseq
    %v740 = vshrl.u32 %v739, 7
    %v741 = vsub.s32 0, %v740
    %v742 = vrot.slane %v737, %v741
    %v743 = vadd.bf16 %v733, %v742
    %v745 = vunpack.c.l.b16 %v743
    %v746 = vunpack.c.h.b16 %v743
    %v747 = vpack.c.b16 %v745, %v745
    %v748 = vpack.c.b16 %v746, %v746
    %751 = vst [vmem:[%s3] sm:$0xf] %v747
    %752 = vst [vmem:[%s3 + $0x4] sm:$0xf] %v748
    // Predicated region
    $region18: #{forward.1} parent=1 // pred_check
      _
    $region19: #{forward.1} parent=1 // pred_check_branch
      %754 = sbr.rel (0) target = $region21
    $region20: #{forward.1} parent=1 // pred_region
      _
    $region21: #{forward.1} parent=1 // pred_fallthru
      _
    // Predicated region
    $region22: #{forward.1} parent=1 // pred_check
      _
    $region23: #{forward.1} parent=1 // pred_check_branch
      %756 = sbr.rel (0) target = $region25
    $region24: #{forward.1} parent=1 // pred_region
      _
    $region25: #{forward.1} parent=1 // pred_fallthru
      _
    %757 = vsyncpa [#allocation3], 1

</llo_original>
